<compile_context>
chip_gen: v5e
topology: v5e:2x2
jax: 0.10.0
libtpu: 0.0.40
codegen_flags: <defaults>
</compile_context>

<pallas_src>
import math

import numpy as np
import jax
import jax.numpy as jnp
from jax.experimental import pallas as pl
from jax.experimental.pallas import tpu as pltpu


# ---------------------------------------------------------------------------
# Interpolation weights (PyTorch F.interpolate bilinear, align_corners=False).
# ---------------------------------------------------------------------------
def _bilinear_weight_matrix(in_size: int, out_size: int) -> np.ndarray:
    """W of shape (out_size, in_size): out = W @ x reproduces torch bilinear
    interpolation (align_corners=False) along one axis."""
    scale = in_size / out_size
    out_idx = np.arange(out_size, dtype=np.float64)
    src = scale * (out_idx + 0.5) - 0.5
    src = np.maximum(src, 0.0)                      # PyTorch clamps below 0
    i0 = np.floor(src).astype(np.int64)
    i0 = np.minimum(i0, in_size - 1)
    i1 = np.minimum(i0 + 1, in_size - 1)
    frac = src - i0
    w = np.zeros((out_size, in_size), dtype=np.float32)
    rows = np.arange(out_size)
    np.add.at(w, (rows, i0), (1.0 - frac).astype(np.float32))
    np.add.at(w, (rows, i1), frac.astype(np.float32))
    return w


def _crop_bilinear_weights(full_size: int, crop_start: int, crop_size: int,
                           out_size: int) -> np.ndarray:
    """(out_size, full_size) matrix performing crop [start, start+size) followed
    by bilinear resize along one axis: out = W @ x_full."""
    w = np.zeros((out_size, full_size), dtype=np.float32)
    w[:, crop_start:crop_start + crop_size] = _bilinear_weight_matrix(crop_size, out_size)
    return w


# ---------------------------------------------------------------------------
# Pallas kernel: block of BB slabs resized per grid step via MXU matmuls.
# ---------------------------------------------------------------------------
def _to_out_dtype(val, dtype):
    # PyTorch interpolates in float; round (not truncate) for integer outputs.
    if not jnp.issubdtype(dtype, jnp.floating):
        val = jnp.round(val)
    return val.astype(dtype)


def _make_resize_kernel(wide_first_matmul: bool):
    """Kernel body shared by the shift=False and shift=True paths.

    Refs (after squeezing size-1 block dims):
      wy_ref : (TH, H)      f32, crop-baked row-interpolation weights
      wxt_ref: (W, TW)      f32, crop-baked column-interpolation weights^T
      x_ref  : (BB, H, W)   input slabs
      o_ref  : (BB, TH, TW) output slabs
    """
    def kernel(wy_ref, wxt_ref, x_ref, o_ref):
        bb, h, w = x_ref.shape
        tw = wxt_ref.shape[1]
        wy = wy_ref[...]
        wxt = wxt_ref[...]
        if wide_first_matmul:
            # Column interpolation for ALL BB slabs as one wide MXU matmul
            # (minor/lane dim preserved by the reshape, so it is layout-free).
            x = x_ref[...].astype(jnp.float32).reshape(bb * h, w)
            a = jnp.dot(x, wxt, preferred_element_type=jnp.float32)       # (BB*H, TW)
            a = a.reshape(bb, h, tw)
            for b in range(bb):                                           # static unroll
                o_ref[b] = _to_out_dtype(
                    jnp.dot(wy, a[b], preferred_element_type=jnp.float32),
                    o_ref.dtype)
        else:
            # Fallback when H is not a multiple of the f32 sublane tile (8):
            # per-slab 2-D matmuls, still BB slabs per grid step.
            for b in range(bb):
                xb = x_ref[b].astype(jnp.float32)                          # (H, W)
                rows = jnp.dot(wy, xb, preferred_element_type=jnp.float32)  # (TH, W)
                o_ref[b] = _to_out_dtype(
                    jnp.dot(rows, wxt, preferred_element_type=jnp.float32),
                    o_ref.dtype)
    return kernel


def _pick_block_slabs(total: int, h: int, w: int, th: int, tw: int,
                      itemsize: int, vmem_budget_bytes: int = 24 << 20) -> int:
    """Slabs per grid step.  Budget is conservative enough for v7x's 64 MiB VMEM
    (32 MiB scoped default) and therefore also for v5e/v6e."""
    per_slab = ((2 * h * w + 2 * th * tw) * itemsize          # double-buffered in/out
                + (h * w + h * tw + th * tw) * 4)             # f32 cast + intermediates
    bb = int(max(1, min(32, vmem_budget_bytes // max(per_slab, 1))))
    bb = min(bb, total)
    # Keep >= 2 grid steps when possible so v7x's two TensorCores both get work.
    while bb > 1 and pl.cdiv(total, bb) < 2:
        bb //= 2
    return max(bb, 1)


# ---------------------------------------------------------------------------
# shift=False: one box for all C*T slabs.
# ---------------------------------------------------------------------------
def _crop_resize_all_frames(frames, box, target_height, target_width):
    c, t, height, width = frames.shape
    i, j, h, w = box
    wy = jnp.asarray(_crop_bilinear_weights(height, i, h, target_height))     # (TH, H)
    wxt = jnp.asarray(_crop_bilinear_weights(width, j, w, target_width).T)    # (W, TW)

    b = c * t
    x = frames.reshape(b, height, width)                     # merge leading dims: free
    itemsize = np.dtype(frames.dtype).itemsize
    bb = _pick_block_slabs(b, height, width, target_height, target_width, itemsize)
    nb = pl.cdiv(b, bb)
    wide = (height % 8 == 0)

    if wide:
        flops = 2 * b * (height * width * target_width
                         + target_height * height * target_width)
    else:
        flops = 2 * b * (target_height * height * width
                         + target_height * width * target_width)
    bytes_acc = (b * height * width * itemsize
                 + b * target_height * target_width * itemsize
                 + (wy.size + wxt.size) * 4)

    out = pl.pallas_call(
        _make_resize_kernel(wide),
        out_shape=jax.ShapeDtypeStruct((b, target_height, target_width), frames.dtype),
        grid=(nb,),
        in_specs=[
            pl.BlockSpec((target_height, height), lambda n: (0, 0)),
            pl.BlockSpec((width, target_width), lambda n: (0, 0)),
            pl.BlockSpec((bb, height, width), lambda n: (n, 0, 0)),
        ],
        out_specs=pl.BlockSpec((bb, target_height, target_width), lambda n: (n, 0, 0)),
        compiler_params=pltpu.CompilerParams(dimension_semantics=("parallel",)),
        cost_estimate=pl.CostEstimate(flops=int(flops), transcendentals=0,
                                      bytes_accessed=int(bytes_acc)),
    )(wy, wxt, x)
    return out.reshape(c, t, target_height, target_width)


# ---------------------------------------------------------------------------
# shift=True: per-frame boxes; single pallas_call with stacked weights.
# ---------------------------------------------------------------------------
def _crop_resize_shifted(frames, boxes, target_height, target_width):
    c, t, height, width = frames.shape
    wy = jnp.asarray(np.stack(
        [_crop_bilinear_weights(height, bi, bh, target_height)
         for (bi, bj, bh, bw) in boxes]))                                  # (T, TH, H)
    wxt = jnp.asarray(np.stack(
        [_crop_bilinear_weights(width, bj, bw, target_width).T
         for (bi, bj, bh, bw) in boxes]))                                  # (T, W, TW)

    itemsize = np.dtype(frames.dtype).itemsize
    bbc = min(c, 8)
    nbc = pl.cdiv(c, bbc)
    wide = (height % 8 == 0)

    if wide:
        flops = 2 * c * t * (height * width * target_width
                             + target_height * height * target_width)
    else:
        flops = 2 * c * t * (target_height * height * width
                             + target_height * width * target_width)
    bytes_acc = (c * t * height * width * itemsize
                 + c * t * target_height * target_width * itemsize
                 + (wy.size + wxt.size) * 4)

    out = pl.pallas_call(
        _make_resize_kernel(wide),
        out_shape=jax.ShapeDtypeStruct((c, t, target_height, target_width), frames.dtype),
        grid=(t, nbc),
        in_specs=[
            pl.BlockSpec((None, target_height, height), lambda ti, ci: (ti, 0, 0)),
            pl.BlockSpec((None, width, target_width), lambda ti, ci: (ti, 0, 0)),
            pl.BlockSpec((bbc, None, height, width), lambda ti, ci: (ci, ti, 0, 0)),
        ],
        out_specs=pl.BlockSpec((bbc, None, target_height, target_width),
                               lambda ti, ci: (ci, ti, 0, 0)),
        compiler_params=pltpu.CompilerParams(
            dimension_semantics=("parallel", "parallel")),
        cost_estimate=pl.CostEstimate(flops=int(flops), transcendentals=0,
                                      bytes_accessed=int(bytes_acc)),
    )(wy, wxt, frames)
    return out


# ---------------------------------------------------------------------------
# Host-side crop parameter sampling (scalar glue; mirrors the torch code).
# All randoms for all tries are pulled from the device in ONE transfer.
# ---------------------------------------------------------------------------
def _get_param_spatial_crop(key, scale, ratio, height, width,
                            log_uniform_ratio=True, num_tries=10):
    assert num_tries >= 1, "num_tries must be at least 1"
    if scale[0] > scale[1]:
        scale = (scale[1], scale[0])
    if ratio is not None and ratio[0] > ratio[1]:
        ratio = (ratio[1], ratio[0])

    u = np.asarray(jax.random.uniform(key, (num_tries, 4), dtype=jnp.float32))
    area = height * width
    for n in range(num_tries):
        target_area = area * (scale[0] + float(u[n, 0]) * (scale[1] - scale[0]))
        if ratio is None:
            aspect_ratio = float(width) / float(height)
        elif log_uniform_ratio:
            log_ratio = (math.log(ratio[0]), math.log(ratio[1]))
            aspect_ratio = math.exp(
                log_ratio[0] + float(u[n, 1]) * (log_ratio[1] - log_ratio[0]))
        else:
            aspect_ratio = ratio[0] + float(u[n, 1]) * (ratio[1] - ratio[0])
        w = int(round(math.sqrt(target_area * aspect_ratio)))
        h = int(round(math.sqrt(target_area / aspect_ratio)))
        if 0 < w <= width and 0 < h <= height:
            i = min(int(float(u[n, 2]) * (height - h + 1)), height - h)
            j = min(int(float(u[n, 3]) * (width - w + 1)), width - w)
            return (i, j, h, w)

    # Central-crop fallback (handles ratio=None instead of raising).
    in_ratio = float(width) / float(height)
    if ratio is None:
        h, w = height, width
    elif in_ratio < min(ratio):
        w = width
        h = int(round(w / min(ratio)))
    elif in_ratio > max(ratio):
        h = height
        w = int(round(h * max(ratio)))
    else:
        w = width
        h = height
    i = (height - h) // 2
    j = (width - w) // 2
    return (i, j, h, w)


# ---------------------------------------------------------------------------
# Full forward.
# ---------------------------------------------------------------------------
def random_resized_crop(frames, target_height, target_width, scale, aspect_ratio,
                        shift=False, log_uniform_ratio=True, interpolation="bilinear",
                        num_tries=10, *, key):
    assert scale[0] > 0 and scale[1] > 0, "scale range must be > 0"
    assert aspect_ratio is None or (aspect_ratio[0] > 0 and aspect_ratio[1] > 0)
    assert frames.ndim == 4, "frames must be (C, T, H, W)"
    if interpolation != "bilinear":
        # TODO(synk): only 'bilinear' interpolation is implemented in the Pallas path.
        raise NotImplementedError("only bilinear interpolation is supported")

    channels, t, height, width = frames.shape
    k1, k2 = jax.random.split(key)
    box = _get_param_spatial_crop(
        k1, scale, aspect_ratio, height, width, log_uniform_ratio, num_tries)

    if not shift:
        return _crop_resize_all_frames(frames, box, target_height, target_width)

    box2 = _get_param_spatial_crop(
        k2, scale, aspect_ratio, height, width, log_uniform_ratio, num_tries)
    i, j, h, w = box
    i_, j_, h_, w_ = box2
    i_s = [int(v) for v in np.linspace(i, i_, num=t)]
    j_s = [int(v) for v in np.linspace(j, j_, num=t)]
    h_s = [int(v) for v in np.linspace(h, h_, num=t)]
    w_s = [int(v) for v in np.linspace(w, w_, num=t)]
    boxes = list(zip(i_s, j_s, h_s, w_s))
    return _crop_resize_shifted(frames, boxes, target_height, target_width)


class RandomResizedCrop:
    """JAX/Pallas port of eztorch RandomResizedCrop (forward only)."""

    def __init__(self, target_height, target_width, scale, aspect_ratio,
                 shift=False, log_uniform_ratio=True, interpolation="bilinear",
                 num_tries=10):
        self._target_height = target_height
        self._target_width = target_width
        self._scale = scale
        self._aspect_ratio = aspect_ratio
        self._shift = shift
        self._log_uniform_ratio = log_uniform_ratio
        self._interpolation = interpolation
        self._num_tries = num_tries

    def __call__(self, x, *, key):
        return random_resized_crop(
            x, self._target_height, self._target_width, self._scale,
            self._aspect_ratio, self._shift, self._log_uniform_ratio,
            self._interpolation, self._num_tries, key=key)


if __name__ == "__main__":
    key = jax.random.PRNGKey(0)
    k_data, k_crop, k_crop_shift = jax.random.split(key, 3)

    C, T, H, W = 4, 8, 16, 16
    TH, TW = 8, 8
    SCALE, RATIO = (0.3, 1.0), (3.0 / 4.0, 4.0 / 3.0)
    frames = jax.random.uniform(k_data, (C, T, H, W), dtype=jnp.float32)

    # ---- shift=False path -------------------------------------------------
    module = RandomResizedCrop(TH, TW, SCALE, RATIO, shift=False)
    out = jax.block_until_ready(module(frames, key=k_crop))
    assert out.shape == (C, T, TH, TW), out.shape
    assert out.dtype == frames.dtype

    # Reference: the SAME sampled box (keys split identically), crop + bilinear
    # resize done with explicit crop-sized matrices in NumPy.
    k1 = jax.random.split(k_crop)[0]
    i, j, h, w = _get_param_spatial_crop(k1, SCALE, RATIO, H, W, True, 10)
    fnp = np.asarray(frames).astype(np.float32)
    wy_s = _bilinear_weight_matrix(h, TH)
    wx_s = _bilinear_weight_matrix(w, TW)
    ref = np.einsum("oh,cthw,pw->ctop", wy_s, fnp[:, :, i:i + h, j:j + w], wx_s)
    np.testing.assert_allclose(np.asarray(out), ref, rtol=1e-5, atol=1e-5)

    # ---- shift=True path --------------------------------------------------
    module_s = RandomResizedCrop(TH, TW, SCALE, RATIO, shift=True)
    out_s = jax.block_until_ready(module_s(frames, key=k_crop_shift))
    assert out_s.shape == (C, T, TH, TW), out_s.shape

    ks1, ks2 = jax.random.split(k_crop_shift)
    b1 = _get_param_spatial_crop(ks1, SCALE, RATIO, H, W, True, 10)
    b2 = _get_param_spatial_crop(ks2, SCALE, RATIO, H, W, True, 10)
    i_s = [int(v) for v in np.linspace(b1[0], b2[0], num=T)]
    j_s = [int(v) for v in np.linspace(b1[1], b2[1], num=T)]
    h_s = [int(v) for v in np.linspace(b1[2], b2[2], num=T)]
    w_s = [int(v) for v in np.linspace(b1[3], b2[3], num=T)]
    ref_s = np.zeros((C, T, TH, TW), np.float32)
    for ti in range(T):
        ii, jj, hh, ww = i_s[ti], j_s[ti], h_s[ti], w_s[ti]
        wy_t = _bilinear_weight_matrix(hh, TH)
        wx_t = _bilinear_weight_matrix(ww, TW)
        ref_s[:, ti] = np.einsum(
            "oh,chw,pw->cop", wy_t, fnp[:, ti, ii:ii + hh, jj:jj + ww], wx_t)
    np.testing.assert_allclose(np.asarray(out_s), ref_s, rtol=1e-5, atol=1e-5)

    print("KERNEL_OK")
</pallas_src>

<mosaic_0001>
module attributes {stable_mosaic.version = 11 : i64} {
  func.func @kernel(%arg0: i32, %arg1: memref<8x16xf32, #tpu.memory_space<vmem>>, %arg2: memref<16x8xf32, #tpu.memory_space<vmem>>, %arg3: memref<16x16x16xf32, #tpu.memory_space<vmem>>, %arg4: memref<16x8x8xf32, #tpu.memory_space<vmem>>) attributes {dimension_semantics = [#tpu.dimension_semantics<parallel>], iteration_bounds = array<i64: 2>, scalar_prefetch = 0 : i64, scratch_operands = 0 : i64, tpu.core_type = #tpu.core_type<tc>, window_params = [{pipeline_mode = #tpu.pipeline_mode<synchronous>, transform_indices = @transform_0, window_bounds = array<i64: 8, 16>}, {pipeline_mode = #tpu.pipeline_mode<synchronous>, transform_indices = @transform_1, window_bounds = array<i64: 16, 8>}, {transform_indices = @transform_2, window_bounds = array<i64: 16, 16, 16>}, {transform_indices = @transform_3, window_bounds = array<i64: 16, 8, 8>}]} {
    %c0 = arith.constant 0 : index
    %c0_0 = arith.constant 0 : index
    %0 = vector.load %arg1[%c0, %c0_0] : memref<8x16xf32, #tpu.memory_space<vmem>>, vector<8x16xf32>
    %c0_1 = arith.constant 0 : index
    %c0_2 = arith.constant 0 : index
    %1 = vector.load %arg2[%c0_1, %c0_2] : memref<16x8xf32, #tpu.memory_space<vmem>>, vector<16x8xf32>
    %c0_3 = arith.constant 0 : index
    %c0_4 = arith.constant 0 : index
    %c0_5 = arith.constant 0 : index
    %2 = vector.load %arg3[%c0_3, %c0_4, %c0_5] : memref<16x16x16xf32, #tpu.memory_space<vmem>>, vector<16x16x16xf32>
    %3 = vector.shape_cast %2 : vector<16x16x16xf32> to vector<256x16xf32>
    %cst = arith.constant dense<0.000000e+00> : vector<256x8xf32>
    %4 = tpu.matmul %3, %1, %cst {dimension_numbers = #tpu.dot_dimension_numbers<[1], [0], [0], [1], [0, 0, 1, 1], [], []>} : vector<256x16xf32>, vector<16x8xf32>, vector<256x8xf32> -> vector<256x8xf32>
    %5 = vector.shape_cast %4 : vector<256x8xf32> to vector<16x16x8xf32>
    %6 = vector.extract_strided_slice %5 {offsets = [0, 0, 0], sizes = [1, 16, 8], strides = [1, 1, 1]} : vector<16x16x8xf32> to vector<1x16x8xf32>
    %7 = vector.shape_cast %6 : vector<1x16x8xf32> to vector<16x8xf32>
    %cst_6 = arith.constant dense<0.000000e+00> : vector<8x8xf32>
    %8 = tpu.matmul %0, %7, %cst_6 {dimension_numbers = #tpu.dot_dimension_numbers<[1], [0], [0], [1], [0, 0, 1, 1], [], []>} : vector<8x16xf32>, vector<16x8xf32>, vector<8x8xf32> -> vector<8x8xf32>
    %c0_7 = arith.constant 0 : index
    %c0_8 = arith.constant 0 : index
    %c0_9 = arith.constant 0 : index
    %9 = vector.load %arg4[%c0_7, %c0_8, %c0_9] : memref<16x8x8xf32, #tpu.memory_space<vmem>>, vector<1x8x8xf32>
    %10 = vector.shape_cast %9 : vector<1x8x8xf32> to vector<8x8xf32>
    %11 = vector.shape_cast %8 : vector<8x8xf32> to vector<1x8x8xf32>
    tpu.vector_store %arg4[%c0_7, %c0_8, %c0_9], %11 {strides = array<i32>} : memref<16x8x8xf32, #tpu.memory_space<vmem>>, vector<1x8x8xf32>,
    %12 = vector.extract_strided_slice %5 {offsets = [1, 0, 0], sizes = [1, 16, 8], strides = [1, 1, 1]} : vector<16x16x8xf32> to vector<1x16x8xf32>
    %13 = vector.shape_cast %12 : vector<1x16x8xf32> to vector<16x8xf32>
    %cst_10 = arith.constant dense<0.000000e+00> : vector<8x8xf32>
    %14 = tpu.matmul %0, %13, %cst_10 {dimension_numbers = #tpu.dot_dimension_numbers<[1], [0], [0], [1], [0, 0, 1, 1], [], []>} : vector<8x16xf32>, vector<16x8xf32>, vector<8x8xf32> -> vector<8x8xf32>
    %c1 = arith.constant 1 : index
    %c0_11 = arith.constant 0 : index
    %c0_12 = arith.constant 0 : index
    %15 = vector.load %arg4[%c1, %c0_11, %c0_12] : memref<16x8x8xf32, #tpu.memory_space<vmem>>, vector<1x8x8xf32>
    %16 = vector.shape_cast %15 : vector<1x8x8xf32> to vector<8x8xf32>
    %17 = vector.shape_cast %14 : vector<8x8xf32> to vector<1x8x8xf32>
    tpu.vector_store %arg4[%c1, %c0_11, %c0_12], %17 {strides = array<i32>} : memref<16x8x8xf32, #tpu.memory_space<vmem>>, vector<1x8x8xf32>,
    %18 = vector.extract_strided_slice %5 {offsets = [2, 0, 0], sizes = [1, 16, 8], strides = [1, 1, 1]} : vector<16x16x8xf32> to vector<1x16x8xf32>
    %19 = vector.shape_cast %18 : vector<1x16x8xf32> to vector<16x8xf32>
    %cst_13 = arith.constant dense<0.000000e+00> : vector<8x8xf32>
    %20 = tpu.matmul %0, %19, %cst_13 {dimension_numbers = #tpu.dot_dimension_numbers<[1], [0], [0], [1], [0, 0, 1, 1], [], []>} : vector<8x16xf32>, vector<16x8xf32>, vector<8x8xf32> -> vector<8x8xf32>
    %c2 = arith.constant 2 : index
    %c0_14 = arith.constant 0 : index
    %c0_15 = arith.constant 0 : index
    %21 = vector.load %arg4[%c2, %c0_14, %c0_15] : memref<16x8x8xf32, #tpu.memory_space<vmem>>, vector<1x8x8xf32>
    %22 = vector.shape_cast %21 : vector<1x8x8xf32> to vector<8x8xf32>
    %23 = vector.shape_cast %20 : vector<8x8xf32> to vector<1x8x8xf32>
    tpu.vector_store %arg4[%c2, %c0_14, %c0_15], %23 {strides = array<i32>} : memref<16x8x8xf32, #tpu.memory_space<vmem>>, vector<1x8x8xf32>,
    %24 = vector.extract_strided_slice %5 {offsets = [3, 0, 0], sizes = [1, 16, 8], strides = [1, 1, 1]} : vector<16x16x8xf32> to vector<1x16x8xf32>
    %25 = vector.shape_cast %24 : vector<1x16x8xf32> to vector<16x8xf32>
    %cst_16 = arith.constant dense<0.000000e+00> : vector<8x8xf32>
    %26 = tpu.matmul %0, %25, %cst_16 {dimension_numbers = #tpu.dot_dimension_numbers<[1], [0], [0], [1], [0, 0, 1, 1], [], []>} : vector<8x16xf32>, vector<16x8xf32>, vector<8x8xf32> -> vector<8x8xf32>
    %c3 = arith.constant 3 : index
    %c0_17 = arith.constant 0 : index
    %c0_18 = arith.constant 0 : index
    %27 = vector.load %arg4[%c3, %c0_17, %c0_18] : memref<16x8x8xf32, #tpu.memory_space<vmem>>, vector<1x8x8xf32>
    %28 = vector.shape_cast %27 : vector<1x8x8xf32> to vector<8x8xf32>
    %29 = vector.shape_cast %26 : vector<8x8xf32> to vector<1x8x8xf32>
    tpu.vector_store %arg4[%c3, %c0_17, %c0_18], %29 {strides = array<i32>} : memref<16x8x8xf32, #tpu.memory_space<vmem>>, vector<1x8x8xf32>,
    %30 = vector.extract_strided_slice %5 {offsets = [4, 0, 0], sizes = [1, 16, 8], strides = [1, 1, 1]} : vector<16x16x8xf32> to vector<1x16x8xf32>
    %31 = vector.shape_cast %30 : vector<1x16x8xf32> to vector<16x8xf32>
    %cst_19 = arith.constant dense<0.000000e+00> : vector<8x8xf32>
    %32 = tpu.matmul %0, %31, %cst_19 {dimension_numbers = #tpu.dot_dimension_numbers<[1], [0], [0], [1], [0, 0, 1, 1], [], []>} : vector<8x16xf32>, vector<16x8xf32>, vector<8x8xf32> -> vector<8x8xf32>
    %c4 = arith.constant 4 : index
    %c0_20 = arith.constant 0 : index
    %c0_21 = arith.constant 0 : index
    %33 = vector.load %arg4[%c4, %c0_20, %c0_21] : memref<16x8x8xf32, #tpu.memory_space<vmem>>, vector<1x8x8xf32>
    %34 = vector.shape_cast %33 : vector<1x8x8xf32> to vector<8x8xf32>
    %35 = vector.shape_cast %32 : vector<8x8xf32> to vector<1x8x8xf32>
    tpu.vector_store %arg4[%c4, %c0_20, %c0_21], %35 {strides = array<i32>} : memref<16x8x8xf32, #tpu.memory_space<vmem>>, vector<1x8x8xf32>,
    %36 = vector.extract_strided_slice %5 {offsets = [5, 0, 0], sizes = [1, 16, 8], strides = [1, 1, 1]} : vector<16x16x8xf32> to vector<1x16x8xf32>
    %37 = vector.shape_cast %36 : vector<1x16x8xf32> to vector<16x8xf32>
    %cst_22 = arith.constant dense<0.000000e+00> : vector<8x8xf32>
    %38 = tpu.matmul %0, %37, %cst_22 {dimension_numbers = #tpu.dot_dimension_numbers<[1], [0], [0], [1], [0, 0, 1, 1], [], []>} : vector<8x16xf32>, vector<16x8xf32>, vector<8x8xf32> -> vector<8x8xf32>
    %c5 = arith.constant 5 : index
    %c0_23 = arith.constant 0 : index
    %c0_24 = arith.constant 0 : index
    %39 = vector.load %arg4[%c5, %c0_23, %c0_24] : memref<16x8x8xf32, #tpu.memory_space<vmem>>, vector<1x8x8xf32>
    %40 = vector.shape_cast %39 : vector<1x8x8xf32> to vector<8x8xf32>
    %41 = vector.shape_cast %38 : vector<8x8xf32> to vector<1x8x8xf32>
    tpu.vector_store %arg4[%c5, %c0_23, %c0_24], %41 {strides = array<i32>} : memref<16x8x8xf32, #tpu.memory_space<vmem>>, vector<1x8x8xf32>,
    %42 = vector.extract_strided_slice %5 {offsets = [6, 0, 0], sizes = [1, 16, 8], strides = [1, 1, 1]} : vector<16x16x8xf32> to vector<1x16x8xf32>
    %43 = vector.shape_cast %42 : vector<1x16x8xf32> to vector<16x8xf32>
    %cst_25 = arith.constant dense<0.000000e+00> : vector<8x8xf32>
    %44 = tpu.matmul %0, %43, %cst_25 {dimension_numbers = #tpu.dot_dimension_numbers<[1], [0], [0], [1], [0, 0, 1, 1], [], []>} : vector<8x16xf32>, vector<16x8xf32>, vector<8x8xf32> -> vector<8x8xf32>
    %c6 = arith.constant 6 : index
    %c0_26 = arith.constant 0 : index
    %c0_27 = arith.constant 0 : index
    %45 = vector.load %arg4[%c6, %c0_26, %c0_27] : memref<16x8x8xf32, #tpu.memory_space<vmem>>, vector<1x8x8xf32>
    %46 = vector.shape_cast %45 : vector<1x8x8xf32> to vector<8x8xf32>
    %47 = vector.shape_cast %44 : vector<8x8xf32> to vector<1x8x8xf32>
    tpu.vector_store %arg4[%c6, %c0_26, %c0_27], %47 {strides = array<i32>} : memref<16x8x8xf32, #tpu.memory_space<vmem>>, vector<1x8x8xf32>,
    %48 = vector.extract_strided_slice %5 {offsets = [7, 0, 0], sizes = [1, 16, 8], strides = [1, 1, 1]} : vector<16x16x8xf32> to vector<1x16x8xf32>
    %49 = vector.shape_cast %48 : vector<1x16x8xf32> to vector<16x8xf32>
    %cst_28 = arith.constant dense<0.000000e+00> : vector<8x8xf32>
    %50 = tpu.matmul %0, %49, %cst_28 {dimension_numbers = #tpu.dot_dimension_numbers<[1], [0], [0], [1], [0, 0, 1, 1], [], []>} : vector<8x16xf32>, vector<16x8xf32>, vector<8x8xf32> -> vector<8x8xf32>
    %c7 = arith.constant 7 : index
    %c0_29 = arith.constant 0 : index
    %c0_30 = arith.constant 0 : index
    %51 = vector.load %arg4[%c7, %c0_29, %c0_30] : memref<16x8x8xf32, #tpu.memory_space<vmem>>, vector<1x8x8xf32>
    %52 = vector.shape_cast %51 : vector<1x8x8xf32> to vector<8x8xf32>
    %53 = vector.shape_cast %50 : vector<8x8xf32> to vector<1x8x8xf32>
    tpu.vector_store %arg4[%c7, %c0_29, %c0_30], %53 {strides = array<i32>} : memref<16x8x8xf32, #tpu.memory_space<vmem>>, vector<1x8x8xf32>,
    %54 = vector.extract_strided_slice %5 {offsets = [8, 0, 0], sizes = [1, 16, 8], strides = [1, 1, 1]} : vector<16x16x8xf32> to vector<1x16x8xf32>
    %55 = vector.shape_cast %54 : vector<1x16x8xf32> to vector<16x8xf32>
    %cst_31 = arith.constant dense<0.000000e+00> : vector<8x8xf32>
    %56 = tpu.matmul %0, %55, %cst_31 {dimension_numbers = #tpu.dot_dimension_numbers<[1], [0], [0], [1], [0, 0, 1, 1], [], []>} : vector<8x16xf32>, vector<16x8xf32>, vector<8x8xf32> -> vector<8x8xf32>
    %c8 = arith.constant 8 : index
    %c0_32 = arith.constant 0 : index
    %c0_33 = arith.constant 0 : index
    %57 = vector.load %arg4[%c8, %c0_32, %c0_33] : memref<16x8x8xf32, #tpu.memory_space<vmem>>, vector<1x8x8xf32>
    %58 = vector.shape_cast %57 : vector<1x8x8xf32> to vector<8x8xf32>
    %59 = vector.shape_cast %56 : vector<8x8xf32> to vector<1x8x8xf32>
    tpu.vector_store %arg4[%c8, %c0_32, %c0_33], %59 {strides = array<i32>} : memref<16x8x8xf32, #tpu.memory_space<vmem>>, vector<1x8x8xf32>,
    %60 = vector.extract_strided_slice %5 {offsets = [9, 0, 0], sizes = [1, 16, 8], strides = [1, 1, 1]} : vector<16x16x8xf32> to vector<1x16x8xf32>
    %61 = vector.shape_cast %60 : vector<1x16x8xf32> to vector<16x8xf32>
    %cst_34 = arith.constant dense<0.000000e+00> : vector<8x8xf32>
    %62 = tpu.matmul %0, %61, %cst_34 {dimension_numbers = #tpu.dot_dimension_numbers<[1], [0], [0], [1], [0, 0, 1, 1], [], []>} : vector<8x16xf32>, vector<16x8xf32>, vector<8x8xf32> -> vector<8x8xf32>
    %c9 = arith.constant 9 : index
    %c0_35 = arith.constant 0 : index
    %c0_36 = arith.constant 0 : index
    %63 = vector.load %arg4[%c9, %c0_35, %c0_36] : memref<16x8x8xf32, #tpu.memory_space<vmem>>, vector<1x8x8xf32>
    %64 = vector.shape_cast %63 : vector<1x8x8xf32> to vector<8x8xf32>
    %65 = vector.shape_cast %62 : vector<8x8xf32> to vector<1x8x8xf32>
    tpu.vector_store %arg4[%c9, %c0_35, %c0_36], %65 {strides = array<i32>} : memref<16x8x8xf32, #tpu.memory_space<vmem>>, vector<1x8x8xf32>,
    %66 = vector.extract_strided_slice %5 {offsets = [10, 0, 0], sizes = [1, 16, 8], strides = [1, 1, 1]} : vector<16x16x8xf32> to vector<1x16x8xf32>
    %67 = vector.shape_cast %66 : vector<1x16x8xf32> to vector<16x8xf32>
    %cst_37 = arith.constant dense<0.000000e+00> : vector<8x8xf32>
    %68 = tpu.matmul %0, %67, %cst_37 {dimension_numbers = #tpu.dot_dimension_numbers<[1], [0], [0], [1], [0, 0, 1, 1], [], []>} : vector<8x16xf32>, vector<16x8xf32>, vector<8x8xf32> -> vector<8x8xf32>
    %c10 = arith.constant 10 : index
    %c0_38 = arith.constant 0 : index
    %c0_39 = arith.constant 0 : index
    %69 = vector.load %arg4[%c10, %c0_38, %c0_39] : memref<16x8x8xf32, #tpu.memory_space<vmem>>, vector<1x8x8xf32>
    %70 = vector.shape_cast %69 : vector<1x8x8xf32> to vector<8x8xf32>
    %71 = vector.shape_cast %68 : vector<8x8xf32> to vector<1x8x8xf32>
    tpu.vector_store %arg4[%c10, %c0_38, %c0_39], %71 {strides = array<i32>} : memref<16x8x8xf32, #tpu.memory_space<vmem>>, vector<1x8x8xf32>,
    %72 = vector.extract_strided_slice %5 {offsets = [11, 0, 0], sizes = [1, 16, 8], strides = [1, 1, 1]} : vector<16x16x8xf32> to vector<1x16x8xf32>
    %73 = vector.shape_cast %72 : vector<1x16x8xf32> to vector<16x8xf32>
    %cst_40 = arith.constant dense<0.000000e+00> : vector<8x8xf32>
    %74 = tpu.matmul %0, %73, %cst_40 {dimension_numbers = #tpu.dot_dimension_numbers<[1], [0], [0], [1], [0, 0, 1, 1], [], []>} : vector<8x16xf32>, vector<16x8xf32>, vector<8x8xf32> -> vector<8x8xf32>
    %c11 = arith.constant 11 : index
    %c0_41 = arith.constant 0 : index
    %c0_42 = arith.constant 0 : index
    %75 = vector.load %arg4[%c11, %c0_41, %c0_42] : memref<16x8x8xf32, #tpu.memory_space<vmem>>, vector<1x8x8xf32>
    %76 = vector.shape_cast %75 : vector<1x8x8xf32> to vector<8x8xf32>
    %77 = vector.shape_cast %74 : vector<8x8xf32> to vector<1x8x8xf32>
    tpu.vector_store %arg4[%c11, %c0_41, %c0_42], %77 {strides = array<i32>} : memref<16x8x8xf32, #tpu.memory_space<vmem>>, vector<1x8x8xf32>,
    %78 = vector.extract_strided_slice %5 {offsets = [12, 0, 0], sizes = [1, 16, 8], strides = [1, 1, 1]} : vector<16x16x8xf32> to vector<1x16x8xf32>
    %79 = vector.shape_cast %78 : vector<1x16x8xf32> to vector<16x8xf32>
    %cst_43 = arith.constant dense<0.000000e+00> : vector<8x8xf32>
    %80 = tpu.matmul %0, %79, %cst_43 {dimension_numbers = #tpu.dot_dimension_numbers<[1], [0], [0], [1], [0, 0, 1, 1], [], []>} : vector<8x16xf32>, vector<16x8xf32>, vector<8x8xf32> -> vector<8x8xf32>
    %c12 = arith.constant 12 : index
    %c0_44 = arith.constant 0 : index
    %c0_45 = arith.constant 0 : index
    %81 = vector.load %arg4[%c12, %c0_44, %c0_45] : memref<16x8x8xf32, #tpu.memory_space<vmem>>, vector<1x8x8xf32>
    %82 = vector.shape_cast %81 : vector<1x8x8xf32> to vector<8x8xf32>
    %83 = vector.shape_cast %80 : vector<8x8xf32> to vector<1x8x8xf32>
    tpu.vector_store %arg4[%c12, %c0_44, %c0_45], %83 {strides = array<i32>} : memref<16x8x8xf32, #tpu.memory_space<vmem>>, vector<1x8x8xf32>,
    %84 = vector.extract_strided_slice %5 {offsets = [13, 0, 0], sizes = [1, 16, 8], strides = [1, 1, 1]} : vector<16x16x8xf32> to vector<1x16x8xf32>
    %85 = vector.shape_cast %84 : vector<1x16x8xf32> to vector<16x8xf32>
    %cst_46 = arith.constant dense<0.000000e+00> : vector<8x8xf32>
    %86 = tpu.matmul %0, %85, %cst_46 {dimension_numbers = #tpu.dot_dimension_numbers<[1], [0], [0], [1], [0, 0, 1, 1], [], []>} : vector<8x16xf32>, vector<16x8xf32>, vector<8x8xf32> -> vector<8x8xf32>
    %c13 = arith.constant 13 : index
    %c0_47 = arith.constant 0 : index
    %c0_48 = arith.constant 0 : index
    %87 = vector.load %arg4[%c13, %c0_47, %c0_48] : memref<16x8x8xf32, #tpu.memory_space<vmem>>, vector<1x8x8xf32>
    %88 = vector.shape_cast %87 : vector<1x8x8xf32> to vector<8x8xf32>
    %89 = vector.shape_cast %86 : vector<8x8xf32> to vector<1x8x8xf32>
    tpu.vector_store %arg4[%c13, %c0_47, %c0_48], %89 {strides = array<i32>} : memref<16x8x8xf32, #tpu.memory_space<vmem>>, vector<1x8x8xf32>,
    %90 = vector.extract_strided_slice %5 {offsets = [14, 0, 0], sizes = [1, 16, 8], strides = [1, 1, 1]} : vector<16x16x8xf32> to vector<1x16x8xf32>
    %91 = vector.shape_cast %90 : vector<1x16x8xf32> to vector<16x8xf32>
    %cst_49 = arith.constant dense<0.000000e+00> : vector<8x8xf32>
    %92 = tpu.matmul %0, %91, %cst_49 {dimension_numbers = #tpu.dot_dimension_numbers<[1], [0], [0], [1], [0, 0, 1, 1], [], []>} : vector<8x16xf32>, vector<16x8xf32>, vector<8x8xf32> -> vector<8x8xf32>
    %c14 = arith.constant 14 : index
    %c0_50 = arith.constant 0 : index
    %c0_51 = arith.constant 0 : index
    %93 = vector.load %arg4[%c14, %c0_50, %c0_51] : memref<16x8x8xf32, #tpu.memory_space<vmem>>, vector<1x8x8xf32>
    %94 = vector.shape_cast %93 : vector<1x8x8xf32> to vector<8x8xf32>
    %95 = vector.shape_cast %92 : vector<8x8xf32> to vector<1x8x8xf32>
    tpu.vector_store %arg4[%c14, %c0_50, %c0_51], %95 {strides = array<i32>} : memref<16x8x8xf32, #tpu.memory_space<vmem>>, vector<1x8x8xf32>,
    %96 = vector.extract_strided_slice %5 {offsets = [15, 0, 0], sizes = [1, 16, 8], strides = [1, 1, 1]} : vector<16x16x8xf32> to vector<1x16x8xf32>
    %97 = vector.shape_cast %96 : vector<1x16x8xf32> to vector<16x8xf32>
    %cst_52 = arith.constant dense<0.000000e+00> : vector<8x8xf32>
    %98 = tpu.matmul %0, %97, %cst_52 {dimension_numbers = #tpu.dot_dimension_numbers<[1], [0], [0], [1], [0, 0, 1, 1], [], []>} : vector<8x16xf32>, vector<16x8xf32>, vector<8x8xf32> -> vector<8x8xf32>
    %c15 = arith.constant 15 : index
    %c0_53 = arith.constant 0 : index
    %c0_54 = arith.constant 0 : index
    %99 = vector.load %arg4[%c15, %c0_53, %c0_54] : memref<16x8x8xf32, #tpu.memory_space<vmem>>, vector<1x8x8xf32>
    %100 = vector.shape_cast %99 : vector<1x8x8xf32> to vector<8x8xf32>
    %101 = vector.shape_cast %98 : vector<8x8xf32> to vector<1x8x8xf32>
    tpu.vector_store %arg4[%c15, %c0_53, %c0_54], %101 {strides = array<i32>} : memref<16x8x8xf32, #tpu.memory_space<vmem>>, vector<1x8x8xf32>,
    return
  }
  func.func @transform_0(%arg0: i32) -> (i32, i32) {
    %c0_i32 = arith.constant 0 : i32
    %c0_i32_0 = arith.constant 0 : i32
    %c0_i32_1 = arith.constant 0 : i32
    return %c0_i32, %c0_i32_0 : i32, i32
  }
  func.func @transform_1(%arg0: i32) -> (i32, i32) {
    %c0_i32 = arith.constant 0 : i32
    %c0_i32_0 = arith.constant 0 : i32
    %c0_i32_1 = arith.constant 0 : i32
    return %c0_i32, %c0_i32_0 : i32, i32
  }
  func.func @transform_2(%arg0: i32) -> (i32, i32, i32) {
    %c0_i32 = arith.constant 0 : i32
    %c0_i32_0 = arith.constant 0 : i32
    %c0_i32_1 = arith.constant 0 : i32
    return %arg0, %c0_i32, %c0_i32_0 : i32, i32, i32
  }
  func.func @transform_3(%arg0: i32) -> (i32, i32, i32) {
    %c0_i32 = arith.constant 0 : i32
    %c0_i32_0 = arith.constant 0 : i32
    %c0_i32_1 = arith.constant 0 : i32
    return %arg0, %c0_i32, %c0_i32_0 : i32, i32, i32
  }
}

</mosaic_0001>

<llo_original>
// kernel: tpu_custom_call.1
$region0: #{tpu_custom_call.1}
  #allocation0 [shape = 'u32[]', space=smem, size = 0x4, offset = 0x4, fixed_abs, tag = 'smem constant byte address 0x4 - core index']
  #allocation1 [shape = 'u32[72,128]{1,0:T(1,128)}', space=vmem, size = 0x9000, scoped, tag = 'internal scratch']
  %s0 = inlined_call_operand.vmem [shape: f32[8,16], index: 0, kind: input, shape index: {}]
  %s1 = inlined_call_operand.vmem [shape: f32[16,8], index: 1, kind: input, shape index: {}]
  %s2 = inlined_call_operand.vmem [shape: f32[32,16,16], index: 2, kind: input, shape index: {}]
  %s3 = inlined_call_operand.vmem [shape: f32[32,8,8], index: 3, kind: output, shape index: {}]
  %s4 = sld [smem:[#allocation0]]
  $region45: #{tpu_custom_call.1} parent=0
    _
  %s6 = ssub.s32 1, %s4
  %s7 = scalar_select 0, %s6, %s4
  loop: start=0, step=1, limit=4
  $region2: #{tpu_custom_call.1} parent=0 // loop_pre_header
    _
  $region3: #{tpu_custom_call.1} parent=0 // loop_header
    %s9 = sphi 0, %s13
    %p10 = scmp.ge.s32.totalorder %s9, 4
    %s17 = sphi 0, %s17
    %s19 = sphi 0, %s17
    %s20 = sphi 0, %s19
    %s34 = sphi 0, %s20
    %s38 = sphi 0, %s38
    %s40 = sphi 0, %s38
    %s41 = sphi 0, %s40
    %s55 = sphi 0, %s41
    %s61 = sphi 0, %s63
    %s64 = sphi 0, %s61
    %s65 = sphi 0, %s64
    %s81 = sphi 0, %s65
    %s87 = sphi 0, %s89
    %s90 = sphi 0, %s87
    %s91 = sphi 0, %s90
    %s107 = sphi 0, %s91
  $region4: #{tpu_custom_call.1} parent=0 // loop_header_branch
    %12 = sbr.rel (%p10) target = $region8
  $region5: #{tpu_custom_call.1} parent=0 // loop_body
    %s14 = ssub.s32 %s9, 1
    %s15 = ssub.s32 %s9, 2
    %s16 = sadd.s32 %s9, 1
    %s18 = sadd.s32 %s17, 1
    %p21 = scmp.eq.s32.totalorder %s9, 1
    %p22 = scmp.ne.s32.totalorder %s17, %s19
    %p23 = scmp.eq.s32.totalorder %s9, 0
    %p24 = por %p22, %p23
    %p25 = scmp.ne.s32.totalorder %s17, %s19
    %p26 = scmp.eq.s32.totalorder %s14, 1
    %p27 = por %p25, %p26
    %p28 = scmp.ne.s32.totalorder %s19, %s20
    %p29 = scmp.eq.s32.totalorder %s14, 0
    %p30 = por %p28, %p29
    %p31 = scmp.ne.s32.totalorder %s19, %s20
    %p32 = scmp.eq.s32.totalorder %s15, 1
    %p33 = por %p31, %p32
    %p35 = scmp.ne.s32.totalorder %s20, %s34
    %p36 = scmp.eq.s32.totalorder %s15, 0
    %p37 = por %p35, %p36
    %s39 = sadd.s32 %s38, 1
    %p42 = scmp.eq.s32.totalorder %s9, 1
    %p43 = scmp.ne.s32.totalorder %s38, %s40
    %p44 = scmp.eq.s32.totalorder %s9, 0
    %p45 = por %p43, %p44
    %p46 = scmp.ne.s32.totalorder %s38, %s40
    %p47 = scmp.eq.s32.totalorder %s14, 1
    %p48 = por %p46, %p47
    %p49 = scmp.ne.s32.totalorder %s40, %s41
    %p50 = scmp.eq.s32.totalorder %s14, 0
    %p51 = por %p49, %p50
    %p52 = scmp.ne.s32.totalorder %s40, %s41
    %p53 = scmp.eq.s32.totalorder %s15, 1
    %p54 = por %p52, %p53
    %p56 = scmp.ne.s32.totalorder %s41, %s55
    %p57 = scmp.eq.s32.totalorder %s15, 0
    %p58 = por %p56, %p57
    %s59 = ssub.s32 %s9, %s16
    %p60 = scmp.eq.s32.totalorder %s59, 0
    %s62 = sadd.s32 %s61, 1
    %s63 = scalar_select %p60, %s61, %s62
    %p66 = pneg %p60
    %p67 = scmp.eq.s32.totalorder %s9, 1
    %p68 = por %p66, %p67
    %p69 = scmp.ne.s32.totalorder %s61, %s64
    %p70 = scmp.eq.s32.totalorder %s9, 0
    %p71 = por %p69, %p70
    %p72 = scmp.ne.s32.totalorder %s61, %s64
    %p73 = scmp.eq.s32.totalorder %s14, 1
    %p74 = por %p72, %p73
    %p75 = scmp.ne.s32.totalorder %s64, %s65
    %p76 = scmp.eq.s32.totalorder %s14, 0
    %p77 = por %p75, %p76
    %p78 = scmp.ne.s32.totalorder %s64, %s65
    %p79 = scmp.eq.s32.totalorder %s15, 1
    %p80 = por %p78, %p79
    %p82 = scmp.ne.s32.totalorder %s65, %s81
    %p83 = scmp.eq.s32.totalorder %s15, 0
    %p84 = por %p82, %p83
    %s85 = ssub.s32 %s9, %s16
    %p86 = scmp.eq.s32.totalorder %s85, 0
    %s88 = sadd.s32 %s87, 1
    %s89 = scalar_select %p86, %s87, %s88
    %p92 = pneg %p86
    %p93 = scmp.eq.s32.totalorder %s9, 1
    %p94 = por %p92, %p93
    %p95 = scmp.ne.s32.totalorder %s87, %s90
    %p96 = scmp.eq.s32.totalorder %s9, 0
    %p97 = por %p95, %p96
    %p98 = scmp.ne.s32.totalorder %s87, %s90
    %p99 = scmp.eq.s32.totalorder %s14, 1
    %p100 = por %p98, %p99
    %p101 = scmp.ne.s32.totalorder %s90, %s91
    %p102 = scmp.eq.s32.totalorder %s14, 0
    %p103 = por %p101, %p102
    %p104 = scmp.ne.s32.totalorder %s90, %s91
    %p105 = scmp.eq.s32.totalorder %s15, 1
    %p106 = por %p104, %p105
    %p108 = scmp.ne.s32.totalorder %s91, %s107
    %p109 = scmp.eq.s32.totalorder %s15, 0
    %p110 = por %p108, %p109
    %p111 = scmp.le.s32.totalorder 1, %s9
    %p112 = scmp.lt.s32.totalorder %s9, 3
    %p113 = pnand %p111, %p112
    %p114 = pneg %p113
    // Predicated region
    $region9: #{tpu_custom_call.1} parent=5 // pred_check
      _
    $region10: #{tpu_custom_call.1} parent=5 // pred_check_branch
      %116 = sbr.rel (%p113) target = $region12
    $region11: #{tpu_custom_call.1} parent=5 // pred_region
      %s117 = ssub.s32 %s9, 1
      // Predicated region
      $region13: #{tpu_custom_call.1} parent=11 // pred_check
        %p118 = pneg %p30
      $region14: #{tpu_custom_call.1} parent=11 // pred_check_branch
        %120 = sbr.rel (%p118) target = $region16
      $region15: #{tpu_custom_call.1} parent=11 // pred_region
        _
      $region16: #{tpu_custom_call.1} parent=11 // pred_fallthru
        _
      // Predicated region
      $region17: #{tpu_custom_call.1} parent=11 // pred_check
        %p121 = pneg %p51
      $region18: #{tpu_custom_call.1} parent=11 // pred_check_branch
        %123 = sbr.rel (%p121) target = $region20
      $region19: #{tpu_custom_call.1} parent=11 // pred_region
        _
      $region20: #{tpu_custom_call.1} parent=11 // pred_fallthru
        _
    $region12: #{tpu_custom_call.1} parent=5 // pred_fallthru
      _
    %p124 = scmp.lt.s32.totalorder %s9, 2
    // Predicated region
    $region21: #{tpu_custom_call.1} parent=5 // pred_check
      %p125 = pneg %p124
    $region22: #{tpu_custom_call.1} parent=5 // pred_check_branch
      %127 = sbr.rel (%p125) target = $region24
    $region23: #{tpu_custom_call.1} parent=5 // pred_region
      // Predicated region
      $region25: #{tpu_custom_call.1} parent=23 // pred_check
        %p128 = pneg %p71
      $region26: #{tpu_custom_call.1} parent=23 // pred_check_branch
        %130 = sbr.rel (%p128) target = $region28
      $region27: #{tpu_custom_call.1} parent=23 // pred_region
        %s131 = smul.u32 16, %s9
        %p132 = scmp.lt.s32.totalorder %s131, 31
        %s133 = scalar_select %p132, %s131, 31
        %s134 = smul.addr %s133, 2
        %s135 = smul.addr %s134, 8
        %s136 = scalar_lea.vmem %s2, %s135
        %s137 = smul.u32 16, %s9
      $region28: #{tpu_custom_call.1} parent=23 // pred_fallthru
        _
    $region24: #{tpu_custom_call.1} parent=5 // pred_fallthru
      _
    %p138 = scmp.le.s32.totalorder 1, %s9
    %p139 = scmp.lt.s32.totalorder %s9, 3
    %p140 = pnand %p138, %p139
    %p141 = pneg %p140
    // Predicated region
    $region29: #{tpu_custom_call.1} parent=5 // pred_check
      _
    $region30: #{tpu_custom_call.1} parent=5 // pred_check_branch
      %143 = sbr.rel (%p140) target = $region32
    $region31: #{tpu_custom_call.1} parent=5 // pred_region
      %s144 = ssub.s32 %s9, 1
      %p145 = pneg %p30
      %p146 = pneg %p27
      %p147 = pneg %p51
      %p148 = pneg %p48
      %s149 = smul.u32 16, %s14
      %p150 = scmp.lt.s32.totalorder %s149, 31
      %s151 = scalar_select %p150, %s149, 31
      %s152 = smul.addr %s151, 2
      %s153 = smul.addr %s152, 8
      %s154 = scalar_lea.vmem %s2, %s153
      %p155 = pneg %p77
      %p156 = pneg %p74
      %p157 = pneg %p103
      %p158 = pneg %p100
      %s159 = smul.u32 16, %s14
      %p160 = scmp.lt.s32.totalorder %s159, 31
      %s161 = scalar_select %p160, %s159, 31
      %s162 = smul.addr %s161, 8
      %s163 = scalar_lea.vmem %s3, %s162
      %s164 = smul.u32 16, %s14
      %p165 = scmp.lt.s32.totalorder %s164, 31
      %s166 = scalar_select %p165, %s164, 31
      %s167 = smul.addr %s166, 2
      %s168 = smul.addr %s167, 8
      %s169 = scalar_lea.vmem %s2, %s168
      %s170 = smul.u32 16, %s14
      %s171 = smul.u32 16, %s14
      %p172 = scmp.lt.s32.totalorder %s171, 31
      %s173 = scalar_select %p172, %s171, 31
      %s174 = smul.addr %s173, 8
      %s175 = scalar_lea.vmem %s3, %s174
      %s176 = smul.u32 16, %s14
      %v177 = vld [vmem:[%s0] sm:$0xff]
      %v178 = vld [vmem:[%s1] sm:$0xff]
      %v179 = vld [vmem:[%s1 + $0x8] sm:$0xff]
      %v180 = vld [vmem:[%s169] sm:$0xff]
      %v181 = vld [vmem:[%s169 + $0x8] sm:$0xff]
      %v182 = vld [vmem:[%s169 + $0x10] sm:$0xff]
      %v183 = vld [vmem:[%s169 + $0x18] sm:$0xff]
      %v184 = vld [vmem:[%s169 + $0x20] sm:$0xff]
      %v185 = vld [vmem:[%s169 + $0x28] sm:$0xff]
      %v186 = vld [vmem:[%s169 + $0x30] sm:$0xff]
      %v187 = vld [vmem:[%s169 + $0x38] sm:$0xff]
      %v188 = vld [vmem:[%s169 + $0x40] sm:$0xff]
      %v189 = vld [vmem:[%s169 + $0x48] sm:$0xff]
      %v190 = vld [vmem:[%s169 + $0x50] sm:$0xff]
      %v191 = vld [vmem:[%s169 + $0x58] sm:$0xff]
      %v192 = vld [vmem:[%s169 + $0x60] sm:$0xff]
      %v193 = vld [vmem:[%s169 + $0x68] sm:$0xff]
      %v194 = vld [vmem:[%s169 + $0x70] sm:$0xff]
      %v195 = vld [vmem:[%s169 + $0x78] sm:$0xff]
      %v196 = vld [vmem:[%s169 + $0x80] sm:$0xff]
      %v197 = vld [vmem:[%s169 + $0x88] sm:$0xff]
      %v198 = vld [vmem:[%s169 + $0x90] sm:$0xff]
      %v199 = vld [vmem:[%s169 + $0x98] sm:$0xff]
      %v200 = vld [vmem:[%s169 + $0xa0] sm:$0xff]
      %v201 = vld [vmem:[%s169 + $0xa8] sm:$0xff]
      %v202 = vld [vmem:[%s169 + $0xb0] sm:$0xff]
      %v203 = vld [vmem:[%s169 + $0xb8] sm:$0xff]
      %v204 = vld [vmem:[%s169 + $0xc0] sm:$0xff]
      %v205 = vld [vmem:[%s169 + $0xc8] sm:$0xff]
      %v206 = vld [vmem:[%s169 + $0xd0] sm:$0xff]
      %v207 = vld [vmem:[%s169 + $0xd8] sm:$0xff]
      %v208 = vld [vmem:[%s169 + $0xe0] sm:$0xff]
      %v209 = vld [vmem:[%s169 + $0xe8] sm:$0xff]
      %v210 = vld [vmem:[%s169 + $0xf0] sm:$0xff]
      %v211 = vld [vmem:[%s169 + $0xf8] sm:$0xff]
      %vm212 = vcmask 130048
      %v214 = vsel %vm212, %v180, 0
      %v217 = vsel %vm212, %v181, 0
      %v220 = vsel %vm212, %v182, 0
      %v223 = vsel %vm212, %v183, 0
      %v226 = vsel %vm212, %v184, 0
      %v229 = vsel %vm212, %v185, 0
      %v232 = vsel %vm212, %v186, 0
      %v235 = vsel %vm212, %v187, 0
      %v238 = vsel %vm212, %v188, 0
      %v241 = vsel %vm212, %v189, 0
      %v244 = vsel %vm212, %v190, 0
      %v247 = vsel %vm212, %v191, 0
      %v250 = vsel %vm212, %v192, 0
      %v253 = vsel %vm212, %v193, 0
      %v256 = vsel %vm212, %v194, 0
      %v259 = vsel %vm212, %v195, 0
      %v262 = vsel %vm212, %v196, 0
      %v265 = vsel %vm212, %v197, 0
      %v268 = vsel %vm212, %v198, 0
      %v271 = vsel %vm212, %v199, 0
      %v274 = vsel %vm212, %v200, 0
      %v277 = vsel %vm212, %v201, 0
      %v280 = vsel %vm212, %v202, 0
      %v283 = vsel %vm212, %v203, 0
      %v286 = vsel %vm212, %v204, 0
      %v289 = vsel %vm212, %v205, 0
      %v292 = vsel %vm212, %v206, 0
      %v295 = vsel %vm212, %v207, 0
      %v298 = vsel %vm212, %v208, 0
      %v301 = vsel %vm212, %v209, 0
      %v304 = vsel %vm212, %v210, 0
      %v307 = vsel %vm212, %v211, 0
      %309 = vmatpush.msra.mxu0 0.0
      %310 = vmatpush.msra.mxu0 0.0
      %311 = vmatpush.msra.mxu0 0.0
      %312 = vmatpush.msra.mxu0 0.0
      %313 = vmatpush.msra.mxu0 0.0
      %314 = vmatpush.msra.mxu0 0.0
      %315 = vmatpush.msra.mxu0 0.0
      %316 = vmatpush.msra.mxu0 0.0
      %317 = vmatpush.msra.mxu0 0.0
      %318 = vmatpush.msra.mxu0 0.0
      %319 = vmatpush.msra.mxu0 0.0
      %320 = vmatpush.msra.mxu0 0.0
      %321 = vmatpush.msra.mxu0 0.0
      %322 = vmatpush.msra.mxu0 0.0
      %323 = vmatpush.msra.mxu0 %v179
      %324 = vmatpush.msra.mxu0 %v178
      %325 = vmatmul.f32.gmra.mxu0 %v214
      %v326 = vpop.f32.mrf.mxu0
      %v327 = vadd.f32 0.0, %v326
      %328 = vmatmul.f32.gmra.mxu0 %v217
      %v329 = vpop.f32.mrf.mxu0
      %v330 = vadd.f32 0.0, %v329
      %331 = vmatmul.f32.gmra.mxu0 %v220
      %v332 = vpop.f32.mrf.mxu0
      %v333 = vadd.f32 0.0, %v332
      %334 = vmatmul.f32.gmra.mxu0 %v223
      %v335 = vpop.f32.mrf.mxu0
      %v336 = vadd.f32 0.0, %v335
      %337 = vmatmul.f32.gmra.mxu0 %v226
      %v338 = vpop.f32.mrf.mxu0
      %v339 = vadd.f32 0.0, %v338
      %340 = vmatmul.f32.gmra.mxu0 %v229
      %v341 = vpop.f32.mrf.mxu0
      %v342 = vadd.f32 0.0, %v341
      %343 = vmatmul.f32.gmra.mxu0 %v232
      %v344 = vpop.f32.mrf.mxu0
      %v345 = vadd.f32 0.0, %v344
      %346 = vmatmul.f32.gmra.mxu0 %v235
      %v347 = vpop.f32.mrf.mxu0
      %v348 = vadd.f32 0.0, %v347
      %349 = vmatmul.f32.gmra.mxu0 %v238
      %v350 = vpop.f32.mrf.mxu0
      %v351 = vadd.f32 0.0, %v350
      %352 = vmatmul.f32.gmra.mxu0 %v241
      %v353 = vpop.f32.mrf.mxu0
      %v354 = vadd.f32 0.0, %v353
      %355 = vmatmul.f32.gmra.mxu0 %v244
      %v356 = vpop.f32.mrf.mxu0
      %v357 = vadd.f32 0.0, %v356
      %358 = vmatmul.f32.gmra.mxu0 %v247
      %v359 = vpop.f32.mrf.mxu0
      %v360 = vadd.f32 0.0, %v359
      %361 = vmatmul.f32.gmra.mxu0 %v250
      %v362 = vpop.f32.mrf.mxu0
      %v363 = vadd.f32 0.0, %v362
      %364 = vmatmul.f32.gmra.mxu0 %v253
      %v365 = vpop.f32.mrf.mxu0
      %v366 = vadd.f32 0.0, %v365
      %367 = vmatmul.f32.gmra.mxu0 %v256
      %v368 = vpop.f32.mrf.mxu0
      %v369 = vadd.f32 0.0, %v368
      %370 = vmatmul.f32.gmra.mxu0 %v259
      %v371 = vpop.f32.mrf.mxu0
      %v372 = vadd.f32 0.0, %v371
      %373 = vmatmul.f32.gmra.mxu0 %v262
      %v374 = vpop.f32.mrf.mxu0
      %v375 = vadd.f32 0.0, %v374
      %376 = vmatmul.f32.gmra.mxu0 %v265
      %v377 = vpop.f32.mrf.mxu0
      %v378 = vadd.f32 0.0, %v377
      %379 = vmatmul.f32.gmra.mxu0 %v268
      %v380 = vpop.f32.mrf.mxu0
      %v381 = vadd.f32 0.0, %v380
      %382 = vmatmul.f32.gmra.mxu0 %v271
      %v383 = vpop.f32.mrf.mxu0
      %v384 = vadd.f32 0.0, %v383
      %385 = vmatmul.f32.gmra.mxu0 %v274
      %v386 = vpop.f32.mrf.mxu0
      %v387 = vadd.f32 0.0, %v386
      %388 = vmatmul.f32.gmra.mxu0 %v277
      %v389 = vpop.f32.mrf.mxu0
      %v390 = vadd.f32 0.0, %v389
      %391 = vmatmul.f32.gmra.mxu0 %v280
      %v392 = vpop.f32.mrf.mxu0
      %v393 = vadd.f32 0.0, %v392
      %394 = vmatmul.f32.gmra.mxu0 %v283
      %v395 = vpop.f32.mrf.mxu0
      %v396 = vadd.f32 0.0, %v395
      %397 = vmatmul.f32.gmra.mxu0 %v286
      %v398 = vpop.f32.mrf.mxu0
      %v399 = vadd.f32 0.0, %v398
      %400 = vmatmul.f32.gmra.mxu0 %v289
      %v401 = vpop.f32.mrf.mxu0
      %v402 = vadd.f32 0.0, %v401
      %403 = vmatmul.f32.gmra.mxu0 %v292
      %v404 = vpop.f32.mrf.mxu0
      %v405 = vadd.f32 0.0, %v404
      %406 = vmatmul.f32.gmra.mxu0 %v295
      %v407 = vpop.f32.mrf.mxu0
      %v408 = vadd.f32 0.0, %v407
      %409 = vmatmul.f32.gmra.mxu0 %v298
      %v410 = vpop.f32.mrf.mxu0
      %v411 = vadd.f32 0.0, %v410
      %412 = vmatmul.f32.gmra.mxu0 %v301
      %v413 = vpop.f32.mrf.mxu0
      %v414 = vadd.f32 0.0, %v413
      %415 = vmatmul.f32.gmra.mxu0 %v304
      %v416 = vpop.f32.mrf.mxu0
      %v417 = vadd.f32 0.0, %v416
      %418 = vmatmul.f32.gmra.mxu0 %v307
      %v419 = vpop.f32.mrf.mxu0
      %v420 = vadd.f32 0.0, %v419
      %421 = vdwg.mxu0
      %v423 = vsel %vm212, %v177, 0
      %425 = vmatpush.msra.mxu0 0.0
      %426 = vmatpush.msra.mxu0 0.0
      %427 = vmatpush.msra.mxu0 0.0
      %428 = vmatpush.msra.mxu0 0.0
      %429 = vmatpush.msra.mxu0 0.0
      %430 = vmatpush.msra.mxu0 0.0
      %431 = vmatpush.msra.mxu0 0.0
      %432 = vmatpush.msra.mxu0 0.0
      %433 = vmatpush.msra.mxu0 0.0
      %434 = vmatpush.msra.mxu0 0.0
      %435 = vmatpush.msra.mxu0 0.0
      %436 = vmatpush.msra.mxu0 0.0
      %437 = vmatpush.msra.mxu0 0.0
      %438 = vmatpush.msra.mxu0 0.0
      %439 = vmatpush.msra.mxu0 %v330
      %440 = vmatpush.msra.mxu0 %v327
      %441 = vmatmul.f32.gmra.mxu0 %v423
      %v442 = vpop.f32.mrf.mxu0
      %v443 = vadd.f32 0.0, %v442
      %444 = vdwg.mxu0
      %vm445 = vcmask 64512
      %446 = vst.msk [vmem:[%s175] sm:$0xff] %vm445, %v443
      %447 = vmatpush.msra.mxu0 0.0
      %448 = vmatpush.msra.mxu0 0.0
      %449 = vmatpush.msra.mxu0 0.0
      %450 = vmatpush.msra.mxu0 0.0
      %451 = vmatpush.msra.mxu0 0.0
      %452 = vmatpush.msra.mxu0 0.0
      %453 = vmatpush.msra.mxu0 0.0
      %454 = vmatpush.msra.mxu0 0.0
      %455 = vmatpush.msra.mxu0 0.0
      %456 = vmatpush.msra.mxu0 0.0
      %457 = vmatpush.msra.mxu0 0.0
      %458 = vmatpush.msra.mxu0 0.0
      %459 = vmatpush.msra.mxu0 0.0
      %460 = vmatpush.msra.mxu0 0.0
      %461 = vmatpush.msra.mxu0 %v336
      %462 = vmatpush.msra.mxu0 %v333
      %463 = vmatmul.f32.gmra.mxu0 %v423
      %v464 = vpop.f32.mrf.mxu0
      %v465 = vadd.f32 0.0, %v464
      %466 = vdwg.mxu0
      %s467 = scalar_lea.vmem %s175, 8
      %468 = vst.msk [vmem:[%s467] sm:$0xff] %vm445, %v465
      %469 = vmatpush.msra.mxu0 0.0
      %470 = vmatpush.msra.mxu0 0.0
      %471 = vmatpush.msra.mxu0 0.0
      %472 = vmatpush.msra.mxu0 0.0
      %473 = vmatpush.msra.mxu0 0.0
      %474 = vmatpush.msra.mxu0 0.0
      %475 = vmatpush.msra.mxu0 0.0
      %476 = vmatpush.msra.mxu0 0.0
      %477 = vmatpush.msra.mxu0 0.0
      %478 = vmatpush.msra.mxu0 0.0
      %479 = vmatpush.msra.mxu0 0.0
      %480 = vmatpush.msra.mxu0 0.0
      %481 = vmatpush.msra.mxu0 0.0
      %482 = vmatpush.msra.mxu0 0.0
      %483 = vmatpush.msra.mxu0 %v342
      %484 = vmatpush.msra.mxu0 %v339
      %485 = vmatmul.f32.gmra.mxu0 %v423
      %v486 = vpop.f32.mrf.mxu0
      %v487 = vadd.f32 0.0, %v486
      %488 = vdwg.mxu0
      %s489 = scalar_lea.vmem %s175, 16
      %490 = vst.msk [vmem:[%s489] sm:$0xff] %vm445, %v487
      %491 = vmatpush.msra.mxu0 0.0
      %492 = vmatpush.msra.mxu0 0.0
      %493 = vmatpush.msra.mxu0 0.0
      %494 = vmatpush.msra.mxu0 0.0
      %495 = vmatpush.msra.mxu0 0.0
      %496 = vmatpush.msra.mxu0 0.0
      %497 = vmatpush.msra.mxu0 0.0
      %498 = vmatpush.msra.mxu0 0.0
      %499 = vmatpush.msra.mxu0 0.0
      %500 = vmatpush.msra.mxu0 0.0
      %501 = vmatpush.msra.mxu0 0.0
      %502 = vmatpush.msra.mxu0 0.0
      %503 = vmatpush.msra.mxu0 0.0
      %504 = vmatpush.msra.mxu0 0.0
      %505 = vmatpush.msra.mxu0 %v348
      %506 = vmatpush.msra.mxu0 %v345
      %507 = vmatmul.f32.gmra.mxu0 %v423
      %v508 = vpop.f32.mrf.mxu0
      %v509 = vadd.f32 0.0, %v508
      %510 = vdwg.mxu0
      %s511 = scalar_lea.vmem %s175, 24
      %512 = vst.msk [vmem:[%s511] sm:$0xff] %vm445, %v509
      %513 = vmatpush.msra.mxu0 0.0
      %514 = vmatpush.msra.mxu0 0.0
      %515 = vmatpush.msra.mxu0 0.0
      %516 = vmatpush.msra.mxu0 0.0
      %517 = vmatpush.msra.mxu0 0.0
      %518 = vmatpush.msra.mxu0 0.0
      %519 = vmatpush.msra.mxu0 0.0
      %520 = vmatpush.msra.mxu0 0.0
      %521 = vmatpush.msra.mxu0 0.0
      %522 = vmatpush.msra.mxu0 0.0
      %523 = vmatpush.msra.mxu0 0.0
      %524 = vmatpush.msra.mxu0 0.0
      %525 = vmatpush.msra.mxu0 0.0
      %526 = vmatpush.msra.mxu0 0.0
      %527 = vmatpush.msra.mxu0 %v354
      %528 = vmatpush.msra.mxu0 %v351
      %529 = vmatmul.f32.gmra.mxu0 %v423
      %v530 = vpop.f32.mrf.mxu0
      %v531 = vadd.f32 0.0, %v530
      %532 = vdwg.mxu0
      %s533 = scalar_lea.vmem %s175, 32
      %534 = vst.msk [vmem:[%s533] sm:$0xff] %vm445, %v531
      %535 = vmatpush.msra.mxu0 0.0
      %536 = vmatpush.msra.mxu0 0.0
      %537 = vmatpush.msra.mxu0 0.0
      %538 = vmatpush.msra.mxu0 0.0
      %539 = vmatpush.msra.mxu0 0.0
      %540 = vmatpush.msra.mxu0 0.0
      %541 = vmatpush.msra.mxu0 0.0
      %542 = vmatpush.msra.mxu0 0.0
      %543 = vmatpush.msra.mxu0 0.0
      %544 = vmatpush.msra.mxu0 0.0
      %545 = vmatpush.msra.mxu0 0.0
      %546 = vmatpush.msra.mxu0 0.0
      %547 = vmatpush.msra.mxu0 0.0
      %548 = vmatpush.msra.mxu0 0.0
      %549 = vmatpush.msra.mxu0 %v360
      %550 = vmatpush.msra.mxu0 %v357
      %551 = vmatmul.f32.gmra.mxu0 %v423
      %v552 = vpop.f32.mrf.mxu0
      %v553 = vadd.f32 0.0, %v552
      %554 = vdwg.mxu0
      %s555 = scalar_lea.vmem %s175, 40
      %556 = vst.msk [vmem:[%s555] sm:$0xff] %vm445, %v553
      %557 = vmatpush.msra.mxu0 0.0
      %558 = vmatpush.msra.mxu0 0.0
      %559 = vmatpush.msra.mxu0 0.0
      %560 = vmatpush.msra.mxu0 0.0
      %561 = vmatpush.msra.mxu0 0.0
      %562 = vmatpush.msra.mxu0 0.0
      %563 = vmatpush.msra.mxu0 0.0
      %564 = vmatpush.msra.mxu0 0.0
      %565 = vmatpush.msra.mxu0 0.0
      %566 = vmatpush.msra.mxu0 0.0
      %567 = vmatpush.msra.mxu0 0.0
      %568 = vmatpush.msra.mxu0 0.0
      %569 = vmatpush.msra.mxu0 0.0
      %570 = vmatpush.msra.mxu0 0.0
      %571 = vmatpush.msra.mxu0 %v366
      %572 = vmatpush.msra.mxu0 %v363
      %573 = vmatmul.f32.gmra.mxu0 %v423
      %v574 = vpop.f32.mrf.mxu0
      %v575 = vadd.f32 0.0, %v574
      %576 = vdwg.mxu0
      %s577 = scalar_lea.vmem %s175, 48
      %578 = vst.msk [vmem:[%s577] sm:$0xff] %vm445, %v575
      %579 = vmatpush.msra.mxu0 0.0
      %580 = vmatpush.msra.mxu0 0.0
      %581 = vmatpush.msra.mxu0 0.0
      %582 = vmatpush.msra.mxu0 0.0
      %583 = vmatpush.msra.mxu0 0.0
      %584 = vmatpush.msra.mxu0 0.0
      %585 = vmatpush.msra.mxu0 0.0
      %586 = vmatpush.msra.mxu0 0.0
      %587 = vmatpush.msra.mxu0 0.0
      %588 = vmatpush.msra.mxu0 0.0
      %589 = vmatpush.msra.mxu0 0.0
      %590 = vmatpush.msra.mxu0 0.0
      %591 = vmatpush.msra.mxu0 0.0
      %592 = vmatpush.msra.mxu0 0.0
      %593 = vmatpush.msra.mxu0 %v372
      %594 = vmatpush.msra.mxu0 %v369
      %595 = vmatmul.f32.gmra.mxu0 %v423
      %v596 = vpop.f32.mrf.mxu0
      %v597 = vadd.f32 0.0, %v596
      %598 = vdwg.mxu0
      %s599 = scalar_lea.vmem %s175, 56
      %600 = vst.msk [vmem:[%s599] sm:$0xff] %vm445, %v597
      %601 = vmatpush.msra.mxu0 0.0
      %602 = vmatpush.msra.mxu0 0.0
      %603 = vmatpush.msra.mxu0 0.0
      %604 = vmatpush.msra.mxu0 0.0
      %605 = vmatpush.msra.mxu0 0.0
      %606 = vmatpush.msra.mxu0 0.0
      %607 = vmatpush.msra.mxu0 0.0
      %608 = vmatpush.msra.mxu0 0.0
      %609 = vmatpush.msra.mxu0 0.0
      %610 = vmatpush.msra.mxu0 0.0
      %611 = vmatpush.msra.mxu0 0.0
      %612 = vmatpush.msra.mxu0 0.0
      %613 = vmatpush.msra.mxu0 0.0
      %614 = vmatpush.msra.mxu0 0.0
      %615 = vmatpush.msra.mxu0 %v378
      %616 = vmatpush.msra.mxu0 %v375
      %617 = vmatmul.f32.gmra.mxu0 %v423
      %v618 = vpop.f32.mrf.mxu0
      %v619 = vadd.f32 0.0, %v618
      %620 = vdwg.mxu0
      %s621 = scalar_lea.vmem %s175, 64
      %622 = vst.msk [vmem:[%s621] sm:$0xff] %vm445, %v619
      %623 = vmatpush.msra.mxu0 0.0
      %624 = vmatpush.msra.mxu0 0.0
      %625 = vmatpush.msra.mxu0 0.0
      %626 = vmatpush.msra.mxu0 0.0
      %627 = vmatpush.msra.mxu0 0.0
      %628 = vmatpush.msra.mxu0 0.0
      %629 = vmatpush.msra.mxu0 0.0
      %630 = vmatpush.msra.mxu0 0.0
      %631 = vmatpush.msra.mxu0 0.0
      %632 = vmatpush.msra.mxu0 0.0
      %633 = vmatpush.msra.mxu0 0.0
      %634 = vmatpush.msra.mxu0 0.0
      %635 = vmatpush.msra.mxu0 0.0
      %636 = vmatpush.msra.mxu0 0.0
      %637 = vmatpush.msra.mxu0 %v384
      %638 = vmatpush.msra.mxu0 %v381
      %639 = vmatmul.f32.gmra.mxu0 %v423
      %v640 = vpop.f32.mrf.mxu0
      %v641 = vadd.f32 0.0, %v640
      %642 = vdwg.mxu0
      %s643 = scalar_lea.vmem %s175, 72
      %644 = vst.msk [vmem:[%s643] sm:$0xff] %vm445, %v641
      %645 = vmatpush.msra.mxu0 0.0
      %646 = vmatpush.msra.mxu0 0.0
      %647 = vmatpush.msra.mxu0 0.0
      %648 = vmatpush.msra.mxu0 0.0
      %649 = vmatpush.msra.mxu0 0.0
      %650 = vmatpush.msra.mxu0 0.0
      %651 = vmatpush.msra.mxu0 0.0
      %652 = vmatpush.msra.mxu0 0.0
      %653 = vmatpush.msra.mxu0 0.0
      %654 = vmatpush.msra.mxu0 0.0
      %655 = vmatpush.msra.mxu0 0.0
      %656 = vmatpush.msra.mxu0 0.0
      %657 = vmatpush.msra.mxu0 0.0
      %658 = vmatpush.msra.mxu0 0.0
      %659 = vmatpush.msra.mxu0 %v390
      %660 = vmatpush.msra.mxu0 %v387
      %661 = vmatmul.f32.gmra.mxu0 %v423
      %v662 = vpop.f32.mrf.mxu0
      %v663 = vadd.f32 0.0, %v662
      %664 = vdwg.mxu0
      %s665 = scalar_lea.vmem %s175, 80
      %666 = vst.msk [vmem:[%s665] sm:$0xff] %vm445, %v663
      %667 = vmatpush.msra.mxu0 0.0
      %668 = vmatpush.msra.mxu0 0.0
      %669 = vmatpush.msra.mxu0 0.0
      %670 = vmatpush.msra.mxu0 0.0
      %671 = vmatpush.msra.mxu0 0.0
      %672 = vmatpush.msra.mxu0 0.0
      %673 = vmatpush.msra.mxu0 0.0
      %674 = vmatpush.msra.mxu0 0.0
      %675 = vmatpush.msra.mxu0 0.0
      %676 = vmatpush.msra.mxu0 0.0
      %677 = vmatpush.msra.mxu0 0.0
      %678 = vmatpush.msra.mxu0 0.0
      %679 = vmatpush.msra.mxu0 0.0
      %680 = vmatpush.msra.mxu0 0.0
      %681 = vmatpush.msra.mxu0 %v396
      %682 = vmatpush.msra.mxu0 %v393
      %683 = vmatmul.f32.gmra.mxu0 %v423
      %v684 = vpop.f32.mrf.mxu0
      %v685 = vadd.f32 0.0, %v684
      %686 = vdwg.mxu0
      %s687 = scalar_lea.vmem %s175, 88
      %688 = vst.msk [vmem:[%s687] sm:$0xff] %vm445, %v685
      %689 = vmatpush.msra.mxu0 0.0
      %690 = vmatpush.msra.mxu0 0.0
      %691 = vmatpush.msra.mxu0 0.0
      %692 = vmatpush.msra.mxu0 0.0
      %693 = vmatpush.msra.mxu0 0.0
      %694 = vmatpush.msra.mxu0 0.0
      %695 = vmatpush.msra.mxu0 0.0
      %696 = vmatpush.msra.mxu0 0.0
      %697 = vmatpush.msra.mxu0 0.0
      %698 = vmatpush.msra.mxu0 0.0
      %699 = vmatpush.msra.mxu0 0.0
      %700 = vmatpush.msra.mxu0 0.0
      %701 = vmatpush.msra.mxu0 0.0
      %702 = vmatpush.msra.mxu0 0.0
      %703 = vmatpush.msra.mxu0 %v402
      %704 = vmatpush.msra.mxu0 %v399
      %705 = vmatmul.f32.gmra.mxu0 %v423
      %v706 = vpop.f32.mrf.mxu0
      %v707 = vadd.f32 0.0, %v706
      %708 = vdwg.mxu0
      %s709 = scalar_lea.vmem %s175, 96
      %710 = vst.msk [vmem:[%s709] sm:$0xff] %vm445, %v707
      %711 = vmatpush.msra.mxu0 0.0
      %712 = vmatpush.msra.mxu0 0.0
      %713 = vmatpush.msra.mxu0 0.0
      %714 = vmatpush.msra.mxu0 0.0
      %715 = vmatpush.msra.mxu0 0.0
      %716 = vmatpush.msra.mxu0 0.0
      %717 = vmatpush.msra.mxu0 0.0
      %718 = vmatpush.msra.mxu0 0.0
      %719 = vmatpush.msra.mxu0 0.0
      %720 = vmatpush.msra.mxu0 0.0
      %721 = vmatpush.msra.mxu0 0.0
      %722 = vmatpush.msra.mxu0 0.0
      %723 = vmatpush.msra.mxu0 0.0
      %724 = vmatpush.msra.mxu0 0.0
      %725 = vmatpush.msra.mxu0 %v408
      %726 = vmatpush.msra.mxu0 %v405
      %727 = vmatmul.f32.gmra.mxu0 %v423
      %v728 = vpop.f32.mrf.mxu0
      %v729 = vadd.f32 0.0, %v728
      %730 = vdwg.mxu0
      %s731 = scalar_lea.vmem %s175, 104
      %732 = vst.msk [vmem:[%s731] sm:$0xff] %vm445, %v729
      %733 = vmatpush.msra.mxu0 0.0
      %734 = vmatpush.msra.mxu0 0.0
      %735 = vmatpush.msra.mxu0 0.0
      %736 = vmatpush.msra.mxu0 0.0
      %737 = vmatpush.msra.mxu0 0.0
      %738 = vmatpush.msra.mxu0 0.0
      %739 = vmatpush.msra.mxu0 0.0
      %740 = vmatpush.msra.mxu0 0.0
      %741 = vmatpush.msra.mxu0 0.0
      %742 = vmatpush.msra.mxu0 0.0
      %743 = vmatpush.msra.mxu0 0.0
      %744 = vmatpush.msra.mxu0 0.0
      %745 = vmatpush.msra.mxu0 0.0
      %746 = vmatpush.msra.mxu0 0.0
      %747 = vmatpush.msra.mxu0 %v414
      %748 = vmatpush.msra.mxu0 %v411
      %749 = vmatmul.f32.gmra.mxu0 %v423
      %v750 = vpop.f32.mrf.mxu0
      %v751 = vadd.f32 0.0, %v750
      %752 = vdwg.mxu0
      %s753 = scalar_lea.vmem %s175, 112
      %754 = vst.msk [vmem:[%s753] sm:$0xff] %vm445, %v751
      %755 = vmatpush.msra.mxu0 0.0
      %756 = vmatpush.msra.mxu0 0.0
      %757 = vmatpush.msra.mxu0 0.0
      %758 = vmatpush.msra.mxu0 0.0
      %759 = vmatpush.msra.mxu0 0.0
      %760 = vmatpush.msra.mxu0 0.0
      %761 = vmatpush.msra.mxu0 0.0
      %762 = vmatpush.msra.mxu0 0.0
      %763 = vmatpush.msra.mxu0 0.0
      %764 = vmatpush.msra.mxu0 0.0
      %765 = vmatpush.msra.mxu0 0.0
      %766 = vmatpush.msra.mxu0 0.0
      %767 = vmatpush.msra.mxu0 0.0
      %768 = vmatpush.msra.mxu0 0.0
      %769 = vmatpush.msra.mxu0 %v420
      %770 = vmatpush.msra.mxu0 %v417
      %771 = vmatmul.f32.gmra.mxu0 %v423
      %v772 = vpop.f32.mrf.mxu0
      %v773 = vadd.f32 0.0, %v772
      %774 = vdwg.mxu0
      %s775 = scalar_lea.vmem %s175, 120
      %776 = vst.msk [vmem:[%s775] sm:$0xff] %vm445, %v773
      %s777 = smul.u32 16, %s14
      %p778 = scmp.lt.s32.totalorder %s777, 31
      %s779 = scalar_select %p778, %s777, 31
      %s780 = smul.addr %s779, 8
      %s781 = scalar_lea.vmem %s3, %s780
      // Predicated region
      $region33: #{tpu_custom_call.1} parent=31 // pred_check
        %p782 = pneg %p100
      $region34: #{tpu_custom_call.1} parent=31 // pred_check_branch
        %784 = sbr.rel (%p782) target = $region36
      $region35: #{tpu_custom_call.1} parent=31 // pred_region
        %s785 = smul.u32 16, %s14
      $region36: #{tpu_custom_call.1} parent=31 // pred_fallthru
        _
    $region32: #{tpu_custom_call.1} parent=5 // pred_fallthru
      _
    %p786 = scmp.le.s32.totalorder 2, %s9
    // Predicated region
    $region37: #{tpu_custom_call.1} parent=5 // pred_check
      %p787 = pneg %p786
    $region38: #{tpu_custom_call.1} parent=5 // pred_check_branch
      %789 = sbr.rel (%p787) target = $region40
    $region39: #{tpu_custom_call.1} parent=5 // pred_region
      %s790 = ssub.s32 %s9, 2
      // Predicated region
      $region41: #{tpu_custom_call.1} parent=39 // pred_check
        %p791 = pneg %p106
      $region42: #{tpu_custom_call.1} parent=39 // pred_check_branch
        %793 = sbr.rel (%p791) target = $region44
      $region43: #{tpu_custom_call.1} parent=39 // pred_region
        %s794 = smul.u32 16, %s15
        %p795 = scmp.lt.s32.totalorder %s794, 31
        %s796 = scalar_select %p795, %s794, 31
        %s797 = smul.addr %s796, 8
        %s798 = scalar_lea.vmem %s3, %s797
      $region44: #{tpu_custom_call.1} parent=39 // pred_fallthru
        _
    $region40: #{tpu_custom_call.1} parent=5 // pred_fallthru
      _
  $region6: #{tpu_custom_call.1} parent=0 // loop_footer
    %s13 = sadd.s32 1, %s9
  $region7: #{tpu_custom_call.1} parent=0 // loop_footer_branch
    %8 = sbr.rel target = $region3
  $region8: #{tpu_custom_call.1} parent=0 // loop_exit
    _

</llo_original>
